<compile_context>
chip_gen: v5e
topology: v5e:2x2
jax: 0.10.0
libtpu: 0.0.40
codegen_flags: <defaults>
</compile_context>

<pallas_src>
import jax
import jax.numpy as jnp
from jax.experimental import pallas as pl
from jax.experimental.pallas import tpu as pltpu

EPS = 1e-5


# --------------------------------------------------------------------------- #
# kernels
# --------------------------------------------------------------------------- #
def _conv3_and_stats(h2d, L, w_ref, y_ref, stats_ref):
    """h2d: (tn*L, Cin) rows of `tn` whole samples of length L (channels-last).
    Computes y = conv1d(k=3, pad=1) via one matmul on [prev | cur | next] taps,
    writes y into y_ref (tn, L, Cout) and per-tile (sum, sum_sq) into stats_ref."""
    rows = h2d.shape[0]
    # position within each sample; roll wraps across sample/tile edges, but those
    # rows are exactly the zero-padding positions -> masked to 0.
    pos = jax.lax.broadcasted_iota(jnp.int32, h2d.shape, 0) % L
    h_prev = jnp.where(pos == 0, 0.0, pltpu.roll(h2d, shift=1, axis=0))
    h_next = jnp.where(pos == L - 1, 0.0, pltpu.roll(h2d, shift=rows - 1, axis=0))
    taps = jnp.concatenate([h_prev, h2d, h_next], axis=-1)          # (rows, 3*Cin)
    y = jnp.dot(taps, w_ref[...], preferred_element_type=jnp.float32)  # (rows, Cout)
    y_ref[...] = y.reshape(y_ref.shape)
    ssum = jnp.sum(y, axis=0, keepdims=True)                        # (1, Cout)
    ssq = jnp.sum(y * y, axis=0, keepdims=True)                     # (1, Cout)
    stats_ref[...] = jnp.concatenate([ssum, ssq], axis=0)[None]     # (1, 2, Cout)


def _conv1_stats_kernel(x_ref, w_ref, y_ref, stats_ref):
    tn, L, cin = x_ref.shape
    _conv3_and_stats(x_ref[...].reshape(tn * L, cin), L, w_ref, y_ref, stats_ref)


def _bn_relu_conv_stats_kernel(y_ref, sc_ref, sh_ref, w_ref, y2_ref, stats_ref):
    tn, L, c = y_ref.shape
    y = y_ref[...].reshape(tn * L, c)
    h = jnp.maximum(y * sc_ref[...] + sh_ref[...], 0.0)             # folded BN + ReLU
    _conv3_and_stats(h, L, w_ref, y2_ref, stats_ref)


def _bn_relu_kernel(y_ref, sc_ref, sh_ref, o_ref):
    tn, L, c = y_ref.shape
    y = y_ref[...].reshape(tn * L, c)
    o_ref[...] = jnp.maximum(y * sc_ref[...] + sh_ref[...], 0.0).reshape(tn, L, c)


# --------------------------------------------------------------------------- #
# wrapper
# --------------------------------------------------------------------------- #
def _pick_samples_per_tile(N, per_sample_bytes, budget_bytes=2 << 20):
    """Largest divisor of N whose tile working set fits a conservative VMEM
    budget (safe for v7x's smaller VMEM with double buffering), capped so the
    grid has >= 2 steps when possible (pipelining / 2-TC megacore)."""
    cap = max(1, N // 2)
    best = 1
    for t in range(1, cap + 1):
        if N % t == 0 and t * per_sample_bytes <= budget_bytes:
            best = t
    return best


def _fold_bn(stats, count, gamma, beta):
    """stats: (num_tiles, 2, Cout) per-tile (sum, sum_sq). Returns (scale, shift)
    with scale = gamma*rsqrt(var+eps), shift = beta - mean*scale (biased var)."""
    ssum = jnp.sum(stats[:, 0, :], axis=0)
    ssq = jnp.sum(stats[:, 1, :], axis=0)
    mean = ssum / count
    var = jnp.maximum(ssq / count - mean * mean, 0.0)
    scale = gamma * jax.lax.rsqrt(var + EPS)
    shift = beta - mean * scale
    return (scale.reshape(1, -1).astype(jnp.float32),
            shift.reshape(1, -1).astype(jnp.float32))


def double_conv1d(x_ncl, params, samples_per_tile=None):
    """x_ncl: (N, Cin, L) float32, PyTorch NCL layout. Returns (N, Cout, L)."""
    N, Cin, L = x_ncl.shape
    Cout = params["w1"].shape[0]

    # channels-last activations; weights -> (3*Cin, Cout) "im2col" matrices.
    x = jnp.transpose(x_ncl, (0, 2, 1)).astype(jnp.float32)          # (N, L, Cin)
    w1s = jnp.transpose(params["w1"], (2, 1, 0)).reshape(3 * Cin, Cout).astype(jnp.float32)
    w2s = jnp.transpose(params["w2"], (2, 1, 0)).reshape(3 * Cout, Cout).astype(jnp.float32)

    per_sample_bytes = 4 * L * (Cin + 10 * Cout)   # rough working set / sample
    tn = samples_per_tile or _pick_samples_per_tile(N, per_sample_bytes)
    num_tiles = N // tn
    grid = (num_tiles,)

    cparams = pltpu.CompilerParams(
        dimension_semantics=("parallel",),
        vmem_limit_bytes=32 * 1024 * 1024,
    )

    def act_spec(C):
        return pl.BlockSpec((tn, L, C), lambda i: (i, 0, 0))

    def full_spec(shape):
        return pl.BlockSpec(shape, lambda i: tuple(0 for _ in shape))

    stats_spec = pl.BlockSpec((1, 2, Cout), lambda i: (i, 0, 0))
    stats_shape = jax.ShapeDtypeStruct((num_tiles, 2, Cout), jnp.float32)
    act_shape = jax.ShapeDtypeStruct((N, L, Cout), jnp.float32)

    # ---- pass 1: conv1 + per-tile channel stats ---------------------------- #
    y1, stats1 = pl.pallas_call(
        _conv1_stats_kernel,
        grid=grid,
        in_specs=[act_spec(Cin), full_spec((3 * Cin, Cout))],
        out_specs=(act_spec(Cout), stats_spec),
        out_shape=(act_shape, stats_shape),
        compiler_params=cparams,
    )(x, w1s)
    sc1, sh1 = _fold_bn(stats1, N * L, params["g1"], params["beta1"])

    # ---- pass 2: bn1 + relu + conv2 + per-tile channel stats --------------- #
    y2, stats2 = pl.pallas_call(
        _bn_relu_conv_stats_kernel,
        grid=grid,
        in_specs=[act_spec(Cout), full_spec((1, Cout)), full_spec((1, Cout)),
                  full_spec((3 * Cout, Cout))],
        out_specs=(act_spec(Cout), stats_spec),
        out_shape=(act_shape, stats_shape),
        compiler_params=cparams,
    )(y1, sc1, sh1, w2s)
    sc2, sh2 = _fold_bn(stats2, N * L, params["g2"], params["beta2"])

    # ---- pass 3: bn2 + relu ------------------------------------------------ #
    out = pl.pallas_call(
        _bn_relu_kernel,
        grid=grid,
        in_specs=[act_spec(Cout), full_spec((1, Cout)), full_spec((1, Cout))],
        out_specs=act_spec(Cout),
        out_shape=act_shape,
        compiler_params=cparams,
    )(y2, sc2, sh2)

    return jnp.transpose(out, (0, 2, 1))                             # back to NCL


# --------------------------------------------------------------------------- #
# pure-JAX reference mirroring PyTorch (fresh module => training-mode BN)
# --------------------------------------------------------------------------- #
def reference(x_ncl, p):
    def conv_bn_relu(x, w, b, g, be):
        y = jax.lax.conv_general_dilated(
            x, w, window_strides=(1,), padding=((1, 1),),
            dimension_numbers=("NCH", "OIH", "NCH"))
        y = y + b[None, :, None]
        mean = jnp.mean(y, axis=(0, 2), keepdims=True)
        var = jnp.mean((y - mean) ** 2, axis=(0, 2), keepdims=True)
        y = (y - mean) * jax.lax.rsqrt(var + EPS) * g[None, :, None] + be[None, :, None]
        return jnp.maximum(y, 0.0)

    h = conv_bn_relu(x_ncl, p["w1"], p["b1"], p["g1"], p["beta1"])
    return conv_bn_relu(h, p["w2"], p["b2"], p["g2"], p["beta2"])


if __name__ == "__main__":
    N, Cin, Cout, L = 2, 4, 8, 16
    key = jax.random.PRNGKey(0)
    ks = jax.random.split(key, 9)

    x = jax.random.normal(ks[0], (N, Cin, L), jnp.float32)
    params = dict(
        # PyTorch layouts: Conv1d weight (Cout, Cin, 3), bias (Cout,), BN gamma/beta (Cout,)
        w1=0.3 * jax.random.normal(ks[1], (Cout, Cin, 3), jnp.float32),
        b1=0.1 * jax.random.normal(ks[2], (Cout,), jnp.float32),
        g1=1.0 + 0.1 * jax.random.normal(ks[3], (Cout,), jnp.float32),
        beta1=0.1 * jax.random.normal(ks[4], (Cout,), jnp.float32),
        w2=0.3 * jax.random.normal(ks[5], (Cout, Cout, 3), jnp.float32),
        b2=0.1 * jax.random.normal(ks[6], (Cout,), jnp.float32),
        g2=1.0 + 0.1 * jax.random.normal(ks[7], (Cout,), jnp.float32),
        beta2=0.1 * jax.random.normal(ks[8], (Cout,), jnp.float32),
    )

    out = jax.block_until_ready(jax.jit(double_conv1d)(x, params))
    ref = jax.block_until_ready(reference(x, params))

    assert out.shape == (N, Cout, L), out.shape
    assert jnp.allclose(out, ref, rtol=1e-3, atol=1e-3), "mismatch vs reference"
    print("KERNEL_OK")
</pallas_src>

<mosaic_0001>
module attributes {stable_mosaic.version = 11 : i64} {
  func.func @_conv1_stats_kernel(%arg0: i32, %arg1: memref<1x16x4xf32, #tpu.memory_space<vmem>>, %arg2: memref<12x8xf32, #tpu.memory_space<vmem>>, %arg3: memref<1x16x8xf32, #tpu.memory_space<vmem>>, %arg4: memref<1x2x8xf32, #tpu.memory_space<vmem>>) attributes {dimension_semantics = [#tpu.dimension_semantics<parallel>], iteration_bounds = array<i64: 2>, scalar_prefetch = 0 : i64, scratch_operands = 0 : i64, tpu.core_type = #tpu.core_type<tc>, window_params = [{transform_indices = @transform_0, window_bounds = array<i64: 1, 16, 4>}, {pipeline_mode = #tpu.pipeline_mode<synchronous>, transform_indices = @transform_1, window_bounds = array<i64: 12, 8>}, {transform_indices = @transform_2, window_bounds = array<i64: 1, 16, 8>}, {transform_indices = @transform_3, window_bounds = array<i64: 1, 2, 8>}]} {
    %c0 = arith.constant 0 : index
    %c0_0 = arith.constant 0 : index
    %c0_1 = arith.constant 0 : index
    %0 = vector.load %arg1[%c0, %c0_0, %c0_1] : memref<1x16x4xf32, #tpu.memory_space<vmem>>, vector<1x16x4xf32>
    %1 = vector.shape_cast %0 : vector<1x16x4xf32> to vector<16x4xf32>
    %2 = tpu.iota {dimensions = array<i32: 0>} : vector<16x4xi32>
    %c16_i32 = arith.constant 16 : i32
    %c0_i32 = arith.constant 0 : i32
    %3 = arith.cmpi eq, %c16_i32, %c0_i32 : i32
    %c1_i32 = arith.constant 1 : i32
    %4 = arith.select %3, %c1_i32, %c16_i32 : i32
    %5 = vector.broadcast %4 : i32 to vector<16x4xi32>
    %6 = arith.remsi %2, %5 : vector<16x4xi32>
    %c0_i32_2 = arith.constant 0 : i32
    %7 = vector.broadcast %c0_i32_2 : i32 to vector<16x4xi32>
    %8 = arith.cmpi ne, %6, %7 : vector<16x4xi32>
    %c0_i32_3 = arith.constant 0 : i32
    %9 = vector.broadcast %c0_i32_3 : i32 to vector<16x4xi32>
    %10 = arith.cmpi slt, %6, %9 : vector<16x4xi32>
    %c0_i32_4 = arith.constant 0 : i32
    %11 = arith.cmpi slt, %4, %c0_i32_4 : i32
    %12 = vector.broadcast %11 : i1 to vector<16x4xi1>
    %13 = vector.broadcast %12 : vector<16x4xi1> to vector<16x4xi1>
    %14 = arith.xori %10, %13 : vector<16x4xi1>
    %15 = arith.andi %14, %8 : vector<16x4xi1>
    %16 = vector.broadcast %4 : i32 to vector<16x4xi32>
    %17 = arith.addi %6, %16 : vector<16x4xi32>
    %18 = arith.select %15, %17, %6 : vector<16x4xi1>, vector<16x4xi32>
    %c0_i32_5 = arith.constant 0 : i32
    %19 = vector.broadcast %c0_i32_5 : i32 to vector<16x4xi32>
    %20 = arith.cmpi eq, %18, %19 : vector<16x4xi32>
    %c1_i32_6 = arith.constant 1 : i32
    %21 = tpu.dynamic_rotate %1 by %c1_i32_6 dim 0 : vector<16x4xf32>, i32 -> vector<16x4xf32>
    %cst = arith.constant 0.000000e+00 : f32
    %22 = vector.broadcast %cst : f32 to vector<16x4xf32>
    %23 = arith.select %20, %22, %21 : vector<16x4xi1>, vector<16x4xf32>
    %c15_i32 = arith.constant 15 : i32
    %24 = vector.broadcast %c15_i32 : i32 to vector<16x4xi32>
    %25 = arith.cmpi eq, %18, %24 : vector<16x4xi32>
    %c15_i32_7 = arith.constant 15 : i32
    %26 = tpu.dynamic_rotate %1 by %c15_i32_7 dim 0 : vector<16x4xf32>, i32 -> vector<16x4xf32>
    %cst_8 = arith.constant 0.000000e+00 : f32
    %27 = vector.broadcast %cst_8 : f32 to vector<16x4xf32>
    %28 = arith.select %25, %27, %26 : vector<16x4xi1>, vector<16x4xf32>
    %29 = tpu.concatenate %23, %1, %28 in 1 : vector<16x4xf32>, vector<16x4xf32>, vector<16x4xf32> -> vector<16x12xf32>
    %c0_9 = arith.constant 0 : index
    %c0_10 = arith.constant 0 : index
    %30 = vector.load %arg2[%c0_9, %c0_10] : memref<12x8xf32, #tpu.memory_space<vmem>>, vector<12x8xf32>
    %cst_11 = arith.constant dense<0.000000e+00> : vector<16x8xf32>
    %31 = tpu.matmul %29, %30, %cst_11 {dimension_numbers = #tpu.dot_dimension_numbers<[1], [0], [0], [1], [0, 0, 1, 1], [], []>} : vector<16x12xf32>, vector<12x8xf32>, vector<16x8xf32> -> vector<16x8xf32>
    %32 = vector.shape_cast %31 : vector<16x8xf32> to vector<1x16x8xf32>
    %c0_12 = arith.constant 0 : index
    %c0_13 = arith.constant 0 : index
    %c0_14 = arith.constant 0 : index
    %33 = vector.load %arg3[%c0_12, %c0_13, %c0_14] : memref<1x16x8xf32, #tpu.memory_space<vmem>>, vector<1x16x8xf32>
    tpu.vector_store %arg3[%c0_12, %c0_13, %c0_14], %32 {strides = array<i32>} : memref<1x16x8xf32, #tpu.memory_space<vmem>>, vector<1x16x8xf32>,
    %cst_15 = arith.constant dense<0.000000e+00> : vector<8xf32>
    %34 = vector.multi_reduction <add>, %31, %cst_15 [0] : vector<16x8xf32> to vector<8xf32>
    %35 = vector.shape_cast %34 : vector<8xf32> to vector<1x8xf32>
    %36 = arith.mulf %31, %31 : vector<16x8xf32>
    %cst_16 = arith.constant dense<0.000000e+00> : vector<8xf32>
    %37 = vector.multi_reduction <add>, %36, %cst_16 [0] : vector<16x8xf32> to vector<8xf32>
    %38 = vector.shape_cast %37 : vector<8xf32> to vector<1x8xf32>
    %39 = tpu.concatenate %35, %38 in 0 : vector<1x8xf32>, vector<1x8xf32> -> vector<2x8xf32>
    %40 = vector.shape_cast %39 : vector<2x8xf32> to vector<1x2x8xf32>
    %c0_17 = arith.constant 0 : index
    %c0_18 = arith.constant 0 : index
    %c0_19 = arith.constant 0 : index
    %41 = vector.load %arg4[%c0_17, %c0_18, %c0_19] : memref<1x2x8xf32, #tpu.memory_space<vmem>>, vector<1x2x8xf32>
    tpu.vector_store %arg4[%c0_17, %c0_18, %c0_19], %40 {strides = array<i32>} : memref<1x2x8xf32, #tpu.memory_space<vmem>>, vector<1x2x8xf32>,
    return
  }
  func.func @transform_0(%arg0: i32) -> (i32, i32, i32) {
    %c0_i32 = arith.constant 0 : i32
    %c0_i32_0 = arith.constant 0 : i32
    %c0_i32_1 = arith.constant 0 : i32
    return %arg0, %c0_i32, %c0_i32_0 : i32, i32, i32
  }
  func.func @transform_1(%arg0: i32) -> (i32, i32) {
    %c0_i32 = arith.constant 0 : i32
    %c0_i32_0 = arith.constant 0 : i32
    %c0_i32_1 = arith.constant 0 : i32
    return %c0_i32, %c0_i32_0 : i32, i32
  }
  func.func @transform_2(%arg0: i32) -> (i32, i32, i32) {
    %c0_i32 = arith.constant 0 : i32
    %c0_i32_0 = arith.constant 0 : i32
    %c0_i32_1 = arith.constant 0 : i32
    return %arg0, %c0_i32, %c0_i32_0 : i32, i32, i32
  }
  func.func @transform_3(%arg0: i32) -> (i32, i32, i32) {
    %c0_i32 = arith.constant 0 : i32
    %c0_i32_0 = arith.constant 0 : i32
    %c0_i32_1 = arith.constant 0 : i32
    return %arg0, %c0_i32, %c0_i32_0 : i32, i32, i32
  }
}

module attributes {stable_mosaic.version = 11 : i64} {
  func.func @_bn_relu_conv_stats_kernel(%arg0: i32, %arg1: memref<1x16x8xf32, #tpu.memory_space<vmem>>, %arg2: memref<1x8xf32, #tpu.memory_space<vmem>>, %arg3: memref<1x8xf32, #tpu.memory_space<vmem>>, %arg4: memref<24x8xf32, #tpu.memory_space<vmem>>, %arg5: memref<1x16x8xf32, #tpu.memory_space<vmem>>, %arg6: memref<1x2x8xf32, #tpu.memory_space<vmem>>) attributes {dimension_semantics = [#tpu.dimension_semantics<parallel>], iteration_bounds = array<i64: 2>, scalar_prefetch = 0 : i64, scratch_operands = 0 : i64, tpu.core_type = #tpu.core_type<tc>, window_params = [{transform_indices = @transform_0, window_bounds = array<i64: 1, 16, 8>}, {pipeline_mode = #tpu.pipeline_mode<synchronous>, transform_indices = @transform_1, window_bounds = array<i64: 1, 8>}, {pipeline_mode = #tpu.pipeline_mode<synchronous>, transform_indices = @transform_2, window_bounds = array<i64: 1, 8>}, {pipeline_mode = #tpu.pipeline_mode<synchronous>, transform_indices = @transform_3, window_bounds = array<i64: 24, 8>}, {transform_indices = @transform_4, window_bounds = array<i64: 1, 16, 8>}, {transform_indices = @transform_5, window_bounds = array<i64: 1, 2, 8>}]} {
    %c0 = arith.constant 0 : index
    %c0_0 = arith.constant 0 : index
    %c0_1 = arith.constant 0 : index
    %0 = vector.load %arg1[%c0, %c0_0, %c0_1] : memref<1x16x8xf32, #tpu.memory_space<vmem>>, vector<1x16x8xf32>
    %1 = vector.shape_cast %0 : vector<1x16x8xf32> to vector<16x8xf32>
    %c0_2 = arith.constant 0 : index
    %c0_3 = arith.constant 0 : index
    %2 = vector.load %arg2[%c0_2, %c0_3] : memref<1x8xf32, #tpu.memory_space<vmem>>, vector<1x8xf32>
    %3 = vector.broadcast %2 : vector<1x8xf32> to vector<16x8xf32>
    %4 = arith.mulf %1, %3 : vector<16x8xf32>
    %c0_4 = arith.constant 0 : index
    %c0_5 = arith.constant 0 : index
    %5 = vector.load %arg3[%c0_4, %c0_5] : memref<1x8xf32, #tpu.memory_space<vmem>>, vector<1x8xf32>
    %6 = vector.broadcast %5 : vector<1x8xf32> to vector<16x8xf32>
    %7 = arith.addf %4, %6 : vector<16x8xf32>
    %cst = arith.constant 0.000000e+00 : f32
    %8 = vector.broadcast %cst : f32 to vector<16x8xf32>
    %9 = arith.maximumf %7, %8 : vector<16x8xf32>
    %10 = tpu.iota {dimensions = array<i32: 0>} : vector<16x8xi32>
    %c16_i32 = arith.constant 16 : i32
    %c0_i32 = arith.constant 0 : i32
    %11 = arith.cmpi eq, %c16_i32, %c0_i32 : i32
    %c1_i32 = arith.constant 1 : i32
    %12 = arith.select %11, %c1_i32, %c16_i32 : i32
    %13 = vector.broadcast %12 : i32 to vector<16x8xi32>
    %14 = arith.remsi %10, %13 : vector<16x8xi32>
    %c0_i32_6 = arith.constant 0 : i32
    %15 = vector.broadcast %c0_i32_6 : i32 to vector<16x8xi32>
    %16 = arith.cmpi ne, %14, %15 : vector<16x8xi32>
    %c0_i32_7 = arith.constant 0 : i32
    %17 = vector.broadcast %c0_i32_7 : i32 to vector<16x8xi32>
    %18 = arith.cmpi slt, %14, %17 : vector<16x8xi32>
    %c0_i32_8 = arith.constant 0 : i32
    %19 = arith.cmpi slt, %12, %c0_i32_8 : i32
    %20 = vector.broadcast %19 : i1 to vector<16x8xi1>
    %21 = vector.broadcast %20 : vector<16x8xi1> to vector<16x8xi1>
    %22 = arith.xori %18, %21 : vector<16x8xi1>
    %23 = arith.andi %22, %16 : vector<16x8xi1>
    %24 = vector.broadcast %12 : i32 to vector<16x8xi32>
    %25 = arith.addi %14, %24 : vector<16x8xi32>
    %26 = arith.select %23, %25, %14 : vector<16x8xi1>, vector<16x8xi32>
    %c0_i32_9 = arith.constant 0 : i32
    %27 = vector.broadcast %c0_i32_9 : i32 to vector<16x8xi32>
    %28 = arith.cmpi eq, %26, %27 : vector<16x8xi32>
    %c1_i32_10 = arith.constant 1 : i32
    %29 = tpu.dynamic_rotate %9 by %c1_i32_10 dim 0 : vector<16x8xf32>, i32 -> vector<16x8xf32>
    %cst_11 = arith.constant 0.000000e+00 : f32
    %30 = vector.broadcast %cst_11 : f32 to vector<16x8xf32>
    %31 = arith.select %28, %30, %29 : vector<16x8xi1>, vector<16x8xf32>
    %c15_i32 = arith.constant 15 : i32
    %32 = vector.broadcast %c15_i32 : i32 to vector<16x8xi32>
    %33 = arith.cmpi eq, %26, %32 : vector<16x8xi32>
    %c15_i32_12 = arith.constant 15 : i32
    %34 = tpu.dynamic_rotate %9 by %c15_i32_12 dim 0 : vector<16x8xf32>, i32 -> vector<16x8xf32>
    %cst_13 = arith.constant 0.000000e+00 : f32
    %35 = vector.broadcast %cst_13 : f32 to vector<16x8xf32>
    %36 = arith.select %33, %35, %34 : vector<16x8xi1>, vector<16x8xf32>
    %37 = tpu.concatenate %31, %9, %36 in 1 : vector<16x8xf32>, vector<16x8xf32>, vector<16x8xf32> -> vector<16x24xf32>
    %c0_14 = arith.constant 0 : index
    %c0_15 = arith.constant 0 : index
    %38 = vector.load %arg4[%c0_14, %c0_15] : memref<24x8xf32, #tpu.memory_space<vmem>>, vector<24x8xf32>
    %cst_16 = arith.constant dense<0.000000e+00> : vector<16x8xf32>
    %39 = tpu.matmul %37, %38, %cst_16 {dimension_numbers = #tpu.dot_dimension_numbers<[1], [0], [0], [1], [0, 0, 1, 1], [], []>} : vector<16x24xf32>, vector<24x8xf32>, vector<16x8xf32> -> vector<16x8xf32>
    %40 = vector.shape_cast %39 : vector<16x8xf32> to vector<1x16x8xf32>
    %c0_17 = arith.constant 0 : index
    %c0_18 = arith.constant 0 : index
    %c0_19 = arith.constant 0 : index
    %41 = vector.load %arg5[%c0_17, %c0_18, %c0_19] : memref<1x16x8xf32, #tpu.memory_space<vmem>>, vector<1x16x8xf32>
    tpu.vector_store %arg5[%c0_17, %c0_18, %c0_19], %40 {strides = array<i32>} : memref<1x16x8xf32, #tpu.memory_space<vmem>>, vector<1x16x8xf32>,
    %cst_20 = arith.constant dense<0.000000e+00> : vector<8xf32>
    %42 = vector.multi_reduction <add>, %39, %cst_20 [0] : vector<16x8xf32> to vector<8xf32>
    %43 = vector.shape_cast %42 : vector<8xf32> to vector<1x8xf32>
    %44 = arith.mulf %39, %39 : vector<16x8xf32>
    %cst_21 = arith.constant dense<0.000000e+00> : vector<8xf32>
    %45 = vector.multi_reduction <add>, %44, %cst_21 [0] : vector<16x8xf32> to vector<8xf32>
    %46 = vector.shape_cast %45 : vector<8xf32> to vector<1x8xf32>
    %47 = tpu.concatenate %43, %46 in 0 : vector<1x8xf32>, vector<1x8xf32> -> vector<2x8xf32>
    %48 = vector.shape_cast %47 : vector<2x8xf32> to vector<1x2x8xf32>
    %c0_22 = arith.constant 0 : index
    %c0_23 = arith.constant 0 : index
    %c0_24 = arith.constant 0 : index
    %49 = vector.load %arg6[%c0_22, %c0_23, %c0_24] : memref<1x2x8xf32, #tpu.memory_space<vmem>>, vector<1x2x8xf32>
    tpu.vector_store %arg6[%c0_22, %c0_23, %c0_24], %48 {strides = array<i32>} : memref<1x2x8xf32, #tpu.memory_space<vmem>>, vector<1x2x8xf32>,
    return
  }
  func.func @transform_0(%arg0: i32) -> (i32, i32, i32) {
    %c0_i32 = arith.constant 0 : i32
    %c0_i32_0 = arith.constant 0 : i32
    %c0_i32_1 = arith.constant 0 : i32
    return %arg0, %c0_i32, %c0_i32_0 : i32, i32, i32
  }
  func.func @transform_1(%arg0: i32) -> (i32, i32) {
    %c0_i32 = arith.constant 0 : i32
    %c0_i32_0 = arith.constant 0 : i32
    %c0_i32_1 = arith.constant 0 : i32
    return %c0_i32, %c0_i32_0 : i32, i32
  }
  func.func @transform_2(%arg0: i32) -> (i32, i32) {
    %c0_i32 = arith.constant 0 : i32
    %c0_i32_0 = arith.constant 0 : i32
    %c0_i32_1 = arith.constant 0 : i32
    return %c0_i32, %c0_i32_0 : i32, i32
  }
  func.func @transform_3(%arg0: i32) -> (i32, i32) {
    %c0_i32 = arith.constant 0 : i32
    %c0_i32_0 = arith.constant 0 : i32
    %c0_i32_1 = arith.constant 0 : i32
    return %c0_i32, %c0_i32_0 : i32, i32
  }
  func.func @transform_4(%arg0: i32) -> (i32, i32, i32) {
    %c0_i32 = arith.constant 0 : i32
    %c0_i32_0 = arith.constant 0 : i32
    %c0_i32_1 = arith.constant 0 : i32
    return %arg0, %c0_i32, %c0_i32_0 : i32, i32, i32
  }
  func.func @transform_5(%arg0: i32) -> (i32, i32, i32) {
    %c0_i32 = arith.constant 0 : i32
    %c0_i32_0 = arith.constant 0 : i32
    %c0_i32_1 = arith.constant 0 : i32
    return %arg0, %c0_i32, %c0_i32_0 : i32, i32, i32
  }
}

module attributes {stable_mosaic.version = 11 : i64} {
  func.func @_bn_relu_kernel(%arg0: i32, %arg1: memref<1x16x8xf32, #tpu.memory_space<vmem>>, %arg2: memref<1x8xf32, #tpu.memory_space<vmem>>, %arg3: memref<1x8xf32, #tpu.memory_space<vmem>>, %arg4: memref<1x16x8xf32, #tpu.memory_space<vmem>>) attributes {dimension_semantics = [#tpu.dimension_semantics<parallel>], iteration_bounds = array<i64: 2>, scalar_prefetch = 0 : i64, scratch_operands = 0 : i64, tpu.core_type = #tpu.core_type<tc>, window_params = [{transform_indices = @transform_0, window_bounds = array<i64: 1, 16, 8>}, {pipeline_mode = #tpu.pipeline_mode<synchronous>, transform_indices = @transform_1, window_bounds = array<i64: 1, 8>}, {pipeline_mode = #tpu.pipeline_mode<synchronous>, transform_indices = @transform_2, window_bounds = array<i64: 1, 8>}, {transform_indices = @transform_3, window_bounds = array<i64: 1, 16, 8>}]} {
    %c0 = arith.constant 0 : index
    %c0_0 = arith.constant 0 : index
    %c0_1 = arith.constant 0 : index
    %0 = vector.load %arg1[%c0, %c0_0, %c0_1] : memref<1x16x8xf32, #tpu.memory_space<vmem>>, vector<1x16x8xf32>
    %1 = vector.shape_cast %0 : vector<1x16x8xf32> to vector<16x8xf32>
    %c0_2 = arith.constant 0 : index
    %c0_3 = arith.constant 0 : index
    %2 = vector.load %arg2[%c0_2, %c0_3] : memref<1x8xf32, #tpu.memory_space<vmem>>, vector<1x8xf32>
    %3 = vector.broadcast %2 : vector<1x8xf32> to vector<16x8xf32>
    %4 = arith.mulf %1, %3 : vector<16x8xf32>
    %c0_4 = arith.constant 0 : index
    %c0_5 = arith.constant 0 : index
    %5 = vector.load %arg3[%c0_4, %c0_5] : memref<1x8xf32, #tpu.memory_space<vmem>>, vector<1x8xf32>
    %6 = vector.broadcast %5 : vector<1x8xf32> to vector<16x8xf32>
    %7 = arith.addf %4, %6 : vector<16x8xf32>
    %cst = arith.constant 0.000000e+00 : f32
    %8 = vector.broadcast %cst : f32 to vector<16x8xf32>
    %9 = arith.maximumf %7, %8 : vector<16x8xf32>
    %10 = vector.shape_cast %9 : vector<16x8xf32> to vector<1x16x8xf32>
    %c0_6 = arith.constant 0 : index
    %c0_7 = arith.constant 0 : index
    %c0_8 = arith.constant 0 : index
    %11 = vector.load %arg4[%c0_6, %c0_7, %c0_8] : memref<1x16x8xf32, #tpu.memory_space<vmem>>, vector<1x16x8xf32>
    tpu.vector_store %arg4[%c0_6, %c0_7, %c0_8], %10 {strides = array<i32>} : memref<1x16x8xf32, #tpu.memory_space<vmem>>, vector<1x16x8xf32>,
    return
  }
  func.func @transform_0(%arg0: i32) -> (i32, i32, i32) {
    %c0_i32 = arith.constant 0 : i32
    %c0_i32_0 = arith.constant 0 : i32
    %c0_i32_1 = arith.constant 0 : i32
    return %arg0, %c0_i32, %c0_i32_0 : i32, i32, i32
  }
  func.func @transform_1(%arg0: i32) -> (i32, i32) {
    %c0_i32 = arith.constant 0 : i32
    %c0_i32_0 = arith.constant 0 : i32
    %c0_i32_1 = arith.constant 0 : i32
    return %c0_i32, %c0_i32_0 : i32, i32
  }
  func.func @transform_2(%arg0: i32) -> (i32, i32) {
    %c0_i32 = arith.constant 0 : i32
    %c0_i32_0 = arith.constant 0 : i32
    %c0_i32_1 = arith.constant 0 : i32
    return %c0_i32, %c0_i32_0 : i32, i32
  }
  func.func @transform_3(%arg0: i32) -> (i32, i32, i32) {
    %c0_i32 = arith.constant 0 : i32
    %c0_i32_0 = arith.constant 0 : i32
    %c0_i32_1 = arith.constant 0 : i32
    return %arg0, %c0_i32, %c0_i32_0 : i32, i32, i32
  }
}

</mosaic_0001>

<llo_original>
// kernel: double_conv1d.5
$region0: #{double_conv1d.5}
  #allocation0 [shape = 'u32[]', space=smem, size = 0x4, offset = 0x4, fixed_abs, tag = 'smem constant byte address 0x4 - core index']
  #allocation1 [shape = 'u32[72,128]{1,0:T(1,128)}', space=vmem, size = 0x9000, scoped, tag = 'internal scratch']
  %s0 = inlined_call_operand.vmem [shape: f32[2,16,8], index: 0, kind: input, shape index: {}]
  %s1 = inlined_call_operand.vmem [shape: f32[1,8], index: 1, kind: input, shape index: {}]
  %s2 = inlined_call_operand.vmem [shape: f32[1,8], index: 2, kind: input, shape index: {}]
  %s3 = inlined_call_operand.vmem [shape: f32[2,16,8], index: 3, kind: output, shape index: {}]
  %s4 = sld [smem:[#allocation0]]
  $region45: #{double_conv1d.5} parent=0
    _
  %s6 = ssub.s32 1, %s4
  %s7 = scalar_select 0, %s6, %s4
  loop: start=0, step=1, limit=4
  $region2: #{double_conv1d.5} parent=0 // loop_pre_header
    _
  $region3: #{double_conv1d.5} parent=0 // loop_header
    %s9 = sphi 0, %s13
    %p10 = scmp.ge.s32.totalorder %s9, 4
    %s19 = sphi 0, %s21
    %s22 = sphi 0, %s19
    %s23 = sphi 0, %s22
    %s39 = sphi 0, %s23
    %s43 = sphi 0, %s43
    %s45 = sphi 0, %s43
    %s46 = sphi 0, %s45
    %s60 = sphi 0, %s46
    %s64 = sphi 0, %s64
    %s66 = sphi 0, %s64
    %s67 = sphi 0, %s66
    %s81 = sphi 0, %s67
    %s87 = sphi 0, %s89
    %s90 = sphi 0, %s87
    %s91 = sphi 0, %s90
    %s107 = sphi 0, %s91
  $region4: #{double_conv1d.5} parent=0 // loop_header_branch
    %12 = sbr.rel (%p10) target = $region8
  $region5: #{double_conv1d.5} parent=0 // loop_body
    %s14 = ssub.s32 %s9, 1
    %s15 = ssub.s32 %s9, 2
    %s16 = sadd.s32 %s9, 1
    %s17 = ssub.s32 %s9, %s16
    %p18 = scmp.eq.s32.totalorder %s17, 0
    %s20 = sadd.s32 %s19, 1
    %s21 = scalar_select %p18, %s19, %s20
    %p24 = pneg %p18
    %p25 = scmp.eq.s32.totalorder %s9, 1
    %p26 = por %p24, %p25
    %p27 = scmp.ne.s32.totalorder %s19, %s22
    %p28 = scmp.eq.s32.totalorder %s9, 0
    %p29 = por %p27, %p28
    %p30 = scmp.ne.s32.totalorder %s19, %s22
    %p31 = scmp.eq.s32.totalorder %s14, 1
    %p32 = por %p30, %p31
    %p33 = scmp.ne.s32.totalorder %s22, %s23
    %p34 = scmp.eq.s32.totalorder %s14, 0
    %p35 = por %p33, %p34
    %p36 = scmp.ne.s32.totalorder %s22, %s23
    %p37 = scmp.eq.s32.totalorder %s15, 1
    %p38 = por %p36, %p37
    %p40 = scmp.ne.s32.totalorder %s23, %s39
    %p41 = scmp.eq.s32.totalorder %s15, 0
    %p42 = por %p40, %p41
    %s44 = sadd.s32 %s43, 1
    %p47 = scmp.eq.s32.totalorder %s9, 1
    %p48 = scmp.ne.s32.totalorder %s43, %s45
    %p49 = scmp.eq.s32.totalorder %s9, 0
    %p50 = por %p48, %p49
    %p51 = scmp.ne.s32.totalorder %s43, %s45
    %p52 = scmp.eq.s32.totalorder %s14, 1
    %p53 = por %p51, %p52
    %p54 = scmp.ne.s32.totalorder %s45, %s46
    %p55 = scmp.eq.s32.totalorder %s14, 0
    %p56 = por %p54, %p55
    %p57 = scmp.ne.s32.totalorder %s45, %s46
    %p58 = scmp.eq.s32.totalorder %s15, 1
    %p59 = por %p57, %p58
    %p61 = scmp.ne.s32.totalorder %s46, %s60
    %p62 = scmp.eq.s32.totalorder %s15, 0
    %p63 = por %p61, %p62
    %s65 = sadd.s32 %s64, 1
    %p68 = scmp.eq.s32.totalorder %s9, 1
    %p69 = scmp.ne.s32.totalorder %s64, %s66
    %p70 = scmp.eq.s32.totalorder %s9, 0
    %p71 = por %p69, %p70
    %p72 = scmp.ne.s32.totalorder %s64, %s66
    %p73 = scmp.eq.s32.totalorder %s14, 1
    %p74 = por %p72, %p73
    %p75 = scmp.ne.s32.totalorder %s66, %s67
    %p76 = scmp.eq.s32.totalorder %s14, 0
    %p77 = por %p75, %p76
    %p78 = scmp.ne.s32.totalorder %s66, %s67
    %p79 = scmp.eq.s32.totalorder %s15, 1
    %p80 = por %p78, %p79
    %p82 = scmp.ne.s32.totalorder %s67, %s81
    %p83 = scmp.eq.s32.totalorder %s15, 0
    %p84 = por %p82, %p83
    %s85 = ssub.s32 %s9, %s16
    %p86 = scmp.eq.s32.totalorder %s85, 0
    %s88 = sadd.s32 %s87, 1
    %s89 = scalar_select %p86, %s87, %s88
    %p92 = pneg %p86
    %p93 = scmp.eq.s32.totalorder %s9, 1
    %p94 = por %p92, %p93
    %p95 = scmp.ne.s32.totalorder %s87, %s90
    %p96 = scmp.eq.s32.totalorder %s9, 0
    %p97 = por %p95, %p96
    %p98 = scmp.ne.s32.totalorder %s87, %s90
    %p99 = scmp.eq.s32.totalorder %s14, 1
    %p100 = por %p98, %p99
    %p101 = scmp.ne.s32.totalorder %s90, %s91
    %p102 = scmp.eq.s32.totalorder %s14, 0
    %p103 = por %p101, %p102
    %p104 = scmp.ne.s32.totalorder %s90, %s91
    %p105 = scmp.eq.s32.totalorder %s15, 1
    %p106 = por %p104, %p105
    %p108 = scmp.ne.s32.totalorder %s91, %s107
    %p109 = scmp.eq.s32.totalorder %s15, 0
    %p110 = por %p108, %p109
    %p111 = scmp.le.s32.totalorder 1, %s9
    %p112 = scmp.lt.s32.totalorder %s9, 3
    %p113 = pnand %p111, %p112
    %p114 = pneg %p113
    // Predicated region
    $region9: #{double_conv1d.5} parent=5 // pred_check
      _
    $region10: #{double_conv1d.5} parent=5 // pred_check_branch
      %116 = sbr.rel (%p113) target = $region12
    $region11: #{double_conv1d.5} parent=5 // pred_region
      %s117 = ssub.s32 %s9, 1
      // Predicated region
      $region13: #{double_conv1d.5} parent=11 // pred_check
        %p118 = pneg %p56
      $region14: #{double_conv1d.5} parent=11 // pred_check_branch
        %120 = sbr.rel (%p118) target = $region16
      $region15: #{double_conv1d.5} parent=11 // pred_region
        _
      $region16: #{double_conv1d.5} parent=11 // pred_fallthru
        _
      // Predicated region
      $region17: #{double_conv1d.5} parent=11 // pred_check
        %p121 = pneg %p77
      $region18: #{double_conv1d.5} parent=11 // pred_check_branch
        %123 = sbr.rel (%p121) target = $region20
      $region19: #{double_conv1d.5} parent=11 // pred_region
        _
      $region20: #{double_conv1d.5} parent=11 // pred_fallthru
        _
    $region12: #{double_conv1d.5} parent=5 // pred_fallthru
      _
    %p124 = scmp.lt.s32.totalorder %s9, 2
    // Predicated region
    $region21: #{double_conv1d.5} parent=5 // pred_check
      %p125 = pneg %p124
    $region22: #{double_conv1d.5} parent=5 // pred_check_branch
      %127 = sbr.rel (%p125) target = $region24
    $region23: #{double_conv1d.5} parent=5 // pred_region
      // Predicated region
      $region25: #{double_conv1d.5} parent=23 // pred_check
        %p128 = pneg %p29
      $region26: #{double_conv1d.5} parent=23 // pred_check_branch
        %130 = sbr.rel (%p128) target = $region28
      $region27: #{double_conv1d.5} parent=23 // pred_region
        %p131 = scmp.lt.s32.totalorder %s9, 1
        %s132 = scalar_select %p131, %s9, 1
        %s133 = smul.addr %s132, 2
        %s134 = smul.addr %s133, 8
        %s135 = scalar_lea.vmem %s0, %s134
      $region28: #{double_conv1d.5} parent=23 // pred_fallthru
        _
    $region24: #{double_conv1d.5} parent=5 // pred_fallthru
      _
    %p136 = scmp.le.s32.totalorder 1, %s9
    %p137 = scmp.lt.s32.totalorder %s9, 3
    %p138 = pnand %p136, %p137
    %p139 = pneg %p138
    // Predicated region
    $region29: #{double_conv1d.5} parent=5 // pred_check
      _
    $region30: #{double_conv1d.5} parent=5 // pred_check_branch
      %141 = sbr.rel (%p138) target = $region32
    $region31: #{double_conv1d.5} parent=5 // pred_region
      %s142 = ssub.s32 %s9, 1
      %p143 = scmp.lt.s32.totalorder %s14, 1
      %s144 = scalar_select %p143, %s14, 1
      %s145 = smul.addr %s144, 2
      %s146 = smul.addr %s145, 8
      %s147 = scalar_lea.vmem %s0, %s146
      %p148 = pneg %p35
      %p149 = pneg %p32
      %p150 = pneg %p56
      %p151 = pneg %p53
      %p152 = pneg %p77
      %p153 = pneg %p74
      %p154 = pneg %p103
      %p155 = pneg %p100
      %p156 = scmp.lt.s32.totalorder %s14, 1
      %s157 = scalar_select %p156, %s14, 1
      %s158 = smul.addr %s157, 2
      %s159 = smul.addr %s158, 8
      %s160 = scalar_lea.vmem %s3, %s159
      %p161 = scmp.lt.s32.totalorder %s14, 1
      %s162 = scalar_select %p161, %s14, 1
      %s163 = smul.addr %s162, 2
      %s164 = smul.addr %s163, 8
      %s165 = scalar_lea.vmem %s0, %s164
      %p166 = scmp.lt.s32.totalorder %s14, 1
      %s167 = scalar_select %p166, %s14, 1
      %s168 = smul.addr %s167, 2
      %s169 = smul.addr %s168, 8
      %s170 = scalar_lea.vmem %s3, %s169
      %v171 = vld [vmem:[%s165] sm:$0xff]
      %v172 = vld [vmem:[%s165 + $0x8] sm:$0xff]
      %v173 = vld [vmem:[%s1] sm:$0x1]
      %v175 = vperm.slane %v173, 0
      %v177 = vmul.f32 %v171, %v175
      %v178 = vmul.f32 %v172, %v175
      %v179 = vld [vmem:[%s2] sm:$0x1]
      %v181 = vperm.slane %v179, 0
      %v183 = vadd.f32 %v177, %v181
      %v184 = vadd.f32 %v178, %v181
      %v185 = vmax.f32 %v183, 0.0
      %v186 = vmax.f32 %v184, 0.0
      %vm187 = vcmask 64512
      %188 = vst.msk [vmem:[%s170] sm:$0xff] %vm187, %v185
      %189 = vst.msk [vmem:[%s170 + $0x8] sm:$0xff] %vm187, %v186
      %p190 = scmp.lt.s32.totalorder %s14, 1
      %s191 = scalar_select %p190, %s14, 1
      %s192 = smul.addr %s191, 2
      %s193 = smul.addr %s192, 8
      %s194 = scalar_lea.vmem %s3, %s193
      // Predicated region
      $region33: #{double_conv1d.5} parent=31 // pred_check
        %p195 = pneg %p100
      $region34: #{double_conv1d.5} parent=31 // pred_check_branch
        %197 = sbr.rel (%p195) target = $region36
      $region35: #{double_conv1d.5} parent=31 // pred_region
        _
      $region36: #{double_conv1d.5} parent=31 // pred_fallthru
        _
    $region32: #{double_conv1d.5} parent=5 // pred_fallthru
      _
    %p198 = scmp.le.s32.totalorder 2, %s9
    // Predicated region
    $region37: #{double_conv1d.5} parent=5 // pred_check
      %p199 = pneg %p198
    $region38: #{double_conv1d.5} parent=5 // pred_check_branch
      %201 = sbr.rel (%p199) target = $region40
    $region39: #{double_conv1d.5} parent=5 // pred_region
      %s202 = ssub.s32 %s9, 2
      // Predicated region
      $region41: #{double_conv1d.5} parent=39 // pred_check
        %p203 = pneg %p106
      $region42: #{double_conv1d.5} parent=39 // pred_check_branch
        %205 = sbr.rel (%p203) target = $region44
      $region43: #{double_conv1d.5} parent=39 // pred_region
        %p206 = scmp.lt.s32.totalorder %s15, 1
        %s207 = scalar_select %p206, %s15, 1
        %s208 = smul.addr %s207, 2
        %s209 = smul.addr %s208, 8
        %s210 = scalar_lea.vmem %s3, %s209
      $region44: #{double_conv1d.5} parent=39 // pred_fallthru
        _
    $region40: #{double_conv1d.5} parent=5 // pred_fallthru
      _
  $region6: #{double_conv1d.5} parent=0 // loop_footer
    %s13 = sadd.s32 1, %s9
  $region7: #{double_conv1d.5} parent=0 // loop_footer_branch
    %8 = sbr.rel target = $region3
  $region8: #{double_conv1d.5} parent=0 // loop_exit
    _

// kernel: double_conv1d.3
$region0: #{double_conv1d.3}
  #allocation0 [shape = 'u32[]', space=smem, size = 0x4, offset = 0x4, fixed_abs, tag = 'smem constant byte address 0x4 - core index']
  #allocation1 [shape = 'u32[72,128]{1,0:T(1,128)}', space=vmem, size = 0x9000, scoped, tag = 'internal scratch']
  %s0 = inlined_call_operand.vmem [shape: f32[2,16,4], index: 0, kind: input, shape index: {}]
  %s1 = inlined_call_operand.vmem [shape: f32[12,8], index: 1, kind: input, shape index: {}]
  %s2 = inlined_call_operand.vmem [shape: f32[2,16,8], index: 2, kind: output, shape index: {0}]
  %s3 = inlined_call_operand.vmem [shape: f32[2,2,8], index: 3, kind: output, shape index: {1}]
  %4 = xla_tuple %s2, %s3
  %s5 = sld [smem:[#allocation0]]
  $region49: #{double_conv1d.3} parent=0
    _
  %s7 = ssub.s32 1, %s5
  %s8 = scalar_select 0, %s7, %s5
  loop: start=0, step=1, limit=4
  $region2: #{double_conv1d.3} parent=0 // loop_pre_header
    _
  $region3: #{double_conv1d.3} parent=0 // loop_header
    %s10 = sphi 0, %s14
    %p11 = scmp.ge.s32.totalorder %s10, 4
    %s20 = sphi 0, %s22
    %s23 = sphi 0, %s20
    %s24 = sphi 0, %s23
    %s40 = sphi 0, %s24
    %s44 = sphi 0, %s44
    %s46 = sphi 0, %s44
    %s47 = sphi 0, %s46
    %s61 = sphi 0, %s47
    %s67 = sphi 0, %s69
    %s70 = sphi 0, %s67
    %s71 = sphi 0, %s70
    %s87 = sphi 0, %s71
    %s93 = sphi 0, %s95
    %s96 = sphi 0, %s93
    %s97 = sphi 0, %s96
    %s113 = sphi 0, %s97
  $region4: #{double_conv1d.3} parent=0 // loop_header_branch
    %13 = sbr.rel (%p11) target = $region8
  $region5: #{double_conv1d.3} parent=0 // loop_body
    %s15 = ssub.s32 %s10, 1
    %s16 = ssub.s32 %s10, 2
    %s17 = sadd.s32 %s10, 1
    %s18 = ssub.s32 %s10, %s17
    %p19 = scmp.eq.s32.totalorder %s18, 0
    %s21 = sadd.s32 %s20, 1
    %s22 = scalar_select %p19, %s20, %s21
    %p25 = pneg %p19
    %p26 = scmp.eq.s32.totalorder %s10, 1
    %p27 = por %p25, %p26
    %p28 = scmp.ne.s32.totalorder %s20, %s23
    %p29 = scmp.eq.s32.totalorder %s10, 0
    %p30 = por %p28, %p29
    %p31 = scmp.ne.s32.totalorder %s20, %s23
    %p32 = scmp.eq.s32.totalorder %s15, 1
    %p33 = por %p31, %p32
    %p34 = scmp.ne.s32.totalorder %s23, %s24
    %p35 = scmp.eq.s32.totalorder %s15, 0
    %p36 = por %p34, %p35
    %p37 = scmp.ne.s32.totalorder %s23, %s24
    %p38 = scmp.eq.s32.totalorder %s16, 1
    %p39 = por %p37, %p38
    %p41 = scmp.ne.s32.totalorder %s24, %s40
    %p42 = scmp.eq.s32.totalorder %s16, 0
    %p43 = por %p41, %p42
    %s45 = sadd.s32 %s44, 1
    %p48 = scmp.eq.s32.totalorder %s10, 1
    %p49 = scmp.ne.s32.totalorder %s44, %s46
    %p50 = scmp.eq.s32.totalorder %s10, 0
    %p51 = por %p49, %p50
    %p52 = scmp.ne.s32.totalorder %s44, %s46
    %p53 = scmp.eq.s32.totalorder %s15, 1
    %p54 = por %p52, %p53
    %p55 = scmp.ne.s32.totalorder %s46, %s47
    %p56 = scmp.eq.s32.totalorder %s15, 0
    %p57 = por %p55, %p56
    %p58 = scmp.ne.s32.totalorder %s46, %s47
    %p59 = scmp.eq.s32.totalorder %s16, 1
    %p60 = por %p58, %p59
    %p62 = scmp.ne.s32.totalorder %s47, %s61
    %p63 = scmp.eq.s32.totalorder %s16, 0
    %p64 = por %p62, %p63
    %s65 = ssub.s32 %s10, %s17
    %p66 = scmp.eq.s32.totalorder %s65, 0
    %s68 = sadd.s32 %s67, 1
    %s69 = scalar_select %p66, %s67, %s68
    %p72 = pneg %p66
    %p73 = scmp.eq.s32.totalorder %s10, 1
    %p74 = por %p72, %p73
    %p75 = scmp.ne.s32.totalorder %s67, %s70
    %p76 = scmp.eq.s32.totalorder %s10, 0
    %p77 = por %p75, %p76
    %p78 = scmp.ne.s32.totalorder %s67, %s70
    %p79 = scmp.eq.s32.totalorder %s15, 1
    %p80 = por %p78, %p79
    %p81 = scmp.ne.s32.totalorder %s70, %s71
    %p82 = scmp.eq.s32.totalorder %s15, 0
    %p83 = por %p81, %p82
    %p84 = scmp.ne.s32.totalorder %s70, %s71
    %p85 = scmp.eq.s32.totalorder %s16, 1
    %p86 = por %p84, %p85
    %p88 = scmp.ne.s32.totalorder %s71, %s87
    %p89 = scmp.eq.s32.totalorder %s16, 0
    %p90 = por %p88, %p89
    %s91 = ssub.s32 %s10, %s17
    %p92 = scmp.eq.s32.totalorder %s91, 0
    %s94 = sadd.s32 %s93, 1
    %s95 = scalar_select %p92, %s93, %s94
    %p98 = pneg %p92
    %p99 = scmp.eq.s32.totalorder %s10, 1
    %p100 = por %p98, %p99
    %p101 = scmp.ne.s32.totalorder %s93, %s96
    %p102 = scmp.eq.s32.totalorder %s10, 0
    %p103 = por %p101, %p102
    %p104 = scmp.ne.s32.totalorder %s93, %s96
    %p105 = scmp.eq.s32.totalorder %s15, 1
    %p106 = por %p104, %p105
    %p107 = scmp.ne.s32.totalorder %s96, %s97
    %p108 = scmp.eq.s32.totalorder %s15, 0
    %p109 = por %p107, %p108
    %p110 = scmp.ne.s32.totalorder %s96, %s97
    %p111 = scmp.eq.s32.totalorder %s16, 1
    %p112 = por %p110, %p111
    %p114 = scmp.ne.s32.totalorder %s97, %s113
    %p115 = scmp.eq.s32.totalorder %s16, 0
    %p116 = por %p114, %p115
    %p117 = scmp.le.s32.totalorder 1, %s10
    %p118 = scmp.lt.s32.totalorder %s10, 3
    %p119 = pnand %p117, %p118
    %p120 = pneg %p119
    // Predicated region
    $region9: #{double_conv1d.3} parent=5 // pred_check
      _
    $region10: #{double_conv1d.3} parent=5 // pred_check_branch
      %122 = sbr.rel (%p119) target = $region12
    $region11: #{double_conv1d.3} parent=5 // pred_region
      %s123 = ssub.s32 %s10, 1
      // Predicated region
      $region13: #{double_conv1d.3} parent=11 // pred_check
        %p124 = pneg %p57
      $region14: #{double_conv1d.3} parent=11 // pred_check_branch
        %126 = sbr.rel (%p124) target = $region16
      $region15: #{double_conv1d.3} parent=11 // pred_region
        _
      $region16: #{double_conv1d.3} parent=11 // pred_fallthru
        _
    $region12: #{double_conv1d.3} parent=5 // pred_fallthru
      _
    %p127 = scmp.lt.s32.totalorder %s10, 2
    // Predicated region
    $region17: #{double_conv1d.3} parent=5 // pred_check
      %p128 = pneg %p127
    $region18: #{double_conv1d.3} parent=5 // pred_check_branch
      %130 = sbr.rel (%p128) target = $region20
    $region19: #{double_conv1d.3} parent=5 // pred_region
      // Predicated region
      $region21: #{double_conv1d.3} parent=19 // pred_check
        %p131 = pneg %p30
      $region22: #{double_conv1d.3} parent=19 // pred_check_branch
        %133 = sbr.rel (%p131) target = $region24
      $region23: #{double_conv1d.3} parent=19 // pred_region
        %p134 = scmp.lt.s32.totalorder %s10, 1
        %s135 = scalar_select %p134, %s10, 1
        %s136 = smul.addr %s135, 2
        %s137 = smul.addr %s136, 8
        %s138 = scalar_lea.vmem %s0, %s137
      $region24: #{double_conv1d.3} parent=19 // pred_fallthru
        _
    $region20: #{double_conv1d.3} parent=5 // pred_fallthru
      _
    %p139 = scmp.le.s32.totalorder 1, %s10
    %p140 = scmp.lt.s32.totalorder %s10, 3
    %p141 = pnand %p139, %p140
    %p142 = pneg %p141
    // Predicated region
    $region25: #{double_conv1d.3} parent=5 // pred_check
      _
    $region26: #{double_conv1d.3} parent=5 // pred_check_branch
      %144 = sbr.rel (%p141) target = $region28
    $region27: #{double_conv1d.3} parent=5 // pred_region
      %s145 = ssub.s32 %s10, 1
      %p146 = scmp.lt.s32.totalorder %s15, 1
      %s147 = scalar_select %p146, %s15, 1
      %s148 = smul.addr %s147, 2
      %s149 = smul.addr %s148, 8
      %s150 = scalar_lea.vmem %s0, %s149
      %p151 = pneg %p36
      %p152 = pneg %p33
      %p153 = pneg %p57
      %p154 = pneg %p54
      %p155 = pneg %p83
      %p156 = pneg %p80
      %p157 = scmp.lt.s32.totalorder %s15, 1
      %s158 = scalar_select %p157, %s15, 1
      %s159 = smul.addr %s158, 2
      %s160 = smul.addr %s159, 8
      %s161 = scalar_lea.vmem %s2, %s160
      %p162 = pneg %p109
      %p163 = pneg %p106
      %p164 = scmp.lt.s32.totalorder %s15, 1
      %s165 = scalar_select %p164, %s15, 1
      %s166 = smul.addr %s165, 2
      %s167 = scalar_lea.vmem %s3, %s166
      %p168 = scmp.lt.s32.totalorder %s15, 1
      %s169 = scalar_select %p168, %s15, 1
      %s170 = smul.addr %s169, 2
      %s171 = smul.addr %s170, 8
      %s172 = scalar_lea.vmem %s0, %s171
      %p173 = scmp.lt.s32.totalorder %s15, 1
      %s174 = scalar_select %p173, %s15, 1
      %s175 = smul.addr %s174, 2
      %s176 = smul.addr %s175, 8
      %s177 = scalar_lea.vmem %s2, %s176
      %p178 = scmp.lt.s32.totalorder %s15, 1
      %s179 = scalar_select %p178, %s15, 1
      %s180 = smul.addr %s179, 2
      %s181 = scalar_lea.vmem %s3, %s180
      %v182 = vld [vmem:[%s172] sm:$0xff]
      %v183 = vld [vmem:[%s172 + $0x8] sm:$0xff]
      %v184 = vlaneseq
      %v185 = vshrl.u32 %v184, 7
      %v186 = vadd.s32 %v185, 8
      %vm187 = vcmp.lt.s32.totalorder %v185, 0
      %v188 = vsub.s32 0, %v185
      %v189 = vsel %vm187, %v188, %v185
      %v190 = vshrl.u32 %v189, 4
      %v191 = vand.u32 %v189, 15
      %v192 = vsub.s32 0, %v191
      %v193 = vsel %vm187, %v192, %v191
      %vm194 = vcmp.lt.s32.totalorder %v186, 0
      %v195 = vsub.s32 0, %v186
      %v196 = vsel %vm194, %v195, %v186
      %v197 = vshrl.u32 %v196, 4
      %v198 = vand.u32 %v196, 15
      %v199 = vsub.s32 0, %v198
      %v200 = vsel %vm194, %v199, %v198
      %vm201 = vcmp.ne.s32.totalorder %v193, 0
      %vm202 = vcmp.ne.s32.totalorder %v200, 0
      %vm203 = vcmp.lt.s32.totalorder %v193, 0
      %vm204 = vcmp.lt.s32.totalorder %v200, 0
      %vm205 = vmand %vm203, %vm201
      %vm206 = vmand %vm204, %vm202
      %v207 = vadd.s32 %v193, 16
      %v208 = vadd.s32 %v200, 16
      %v209 = vsel %vm205, %v207, %v193
      %v210 = vsel %vm206, %v208, %v200
      %vm211 = vcmp.eq.s32.totalorder %v209, 0
      %vm212 = vcmp.eq.s32.totalorder %v210, 0
      %v213 = vrot.slane %v182, 7
      %v214 = vrot.slane %v183, 7
      %vm215 = vcmp.lt.s32.totalorder %v185, 1
      %v216 = vsel %vm215, %v213, %v214
      %v217 = vsel %vm215, %v214, %v213
      %v218 = vsel %vm211, 0.0, %v217
      %v219 = vsel %vm212, 0.0, %v216
      %vm220 = vcmp.eq.s32.totalorder %v209, 15
      %vm221 = vcmp.eq.s32.totalorder %v210, 15
      %v222 = vrot.slane %v182, 1
      %v223 = vrot.slane %v183, 1
      %vm224 = vcmp.lt.s32.totalorder %v185, 7
      %v225 = vsel %vm224, %v222, %v223
      %v226 = vsel %vm224, %v223, %v222
      %v227 = vsel %vm220, 0.0, %v225
      %v228 = vsel %vm221, 0.0, %v226
      %231 = vrot.lane.b32.xlu0 %v182, 4
      %v232 = vpop.permute.xlu0 %231
      %233 = vrot.lane.b32.xlu0 %v183, 4
      %v234 = vpop.permute.xlu0 %233
      %239 = vrot.lane.b32.xlu0 %v227, 8
      %v240 = vpop.permute.xlu0 %239
      %241 = vrot.lane.b32.xlu0 %v228, 8
      %v242 = vpop.permute.xlu0 %241
      %vm245 = vcmask 31744
      %v246 = vsel %vm245, %v218, %v232
      %v247 = vsel %vm245, %v219, %v234
      %vm248 = vcmask 64512
      %v249 = vsel %vm248, %v246, %v240
      %v250 = vsel %vm248, %v247, %v242
      %v251 = vld [vmem:[%s1] sm:$0xff]
      %v252 = vld [vmem:[%s1 + $0x8] sm:$0xf]
      %vm253 = vcmask 97280
      %v255 = vsel %vm253, %v249, 0
      %v258 = vsel %vm253, %v250, 0
      %vm260 = vcmask 1043456
      %v262 = vsel %vm260, %v252, 0
      %264 = vmatpush.msra.mxu0 0.0
      %265 = vmatpush.msra.mxu0 0.0
      %266 = vmatpush.msra.mxu0 0.0
      %267 = vmatpush.msra.mxu0 0.0
      %268 = vmatpush.msra.mxu0 0.0
      %269 = vmatpush.msra.mxu0 0.0
      %270 = vmatpush.msra.mxu0 0.0
      %271 = vmatpush.msra.mxu0 0.0
      %272 = vmatpush.msra.mxu0 0.0
      %273 = vmatpush.msra.mxu0 0.0
      %274 = vmatpush.msra.mxu0 0.0
      %275 = vmatpush.msra.mxu0 0.0
      %276 = vmatpush.msra.mxu0 0.0
      %277 = vmatpush.msra.mxu0 0.0
      %278 = vmatpush.msra.mxu0 %v262
      %279 = vmatpush.msra.mxu0 %v251
      %280 = vmatmul.f32.gmra.mxu0 %v255
      %v281 = vpop.f32.mrf.mxu0
      %v282 = vadd.f32 0.0, %v281
      %283 = vmatmul.f32.gmra.mxu0 %v258
      %v284 = vpop.f32.mrf.mxu0
      %v285 = vadd.f32 0.0, %v284
      %286 = vdwg.mxu0
      %287 = vst.msk [vmem:[%s177] sm:$0xff] %vm248, %v282
      %288 = vst.msk [vmem:[%s177 + $0x8] sm:$0xff] %vm248, %v285
      %v289 = vsel %vm248, %v282, 0.0
      %v290 = vsel %vm248, %v285, 0.0
      %v291 = vadd.f32 %v289, %v290
      %v292 = vrot.slane %v291, 4
      %v293 = vadd.f32 %v291, %v292
      %v294 = vrot.slane %v293, 2
      %v295 = vadd.f32 %v293, %v294
      %v296 = vrot.slane %v295, 1
      %v297 = vadd.f32 %v295, %v296
      %v298 = vmul.f32 %v282, %v282
      %v299 = vmul.f32 %v285, %v285
      %v300 = vsel %vm248, %v298, 0.0
      %v301 = vsel %vm248, %v299, 0.0
      %v302 = vadd.f32 %v300, %v301
      %v303 = vrot.slane %v302, 4
      %v304 = vadd.f32 %v302, %v303
      %v305 = vrot.slane %v304, 2
      %v306 = vadd.f32 %v304, %v305
      %v307 = vrot.slane %v306, 1
      %v308 = vadd.f32 %v306, %v307
      %vm309 = vcmask 1040384
      %v310 = vsel %vm309, %v297, %v308
      %vm311 = vcmask 58368
      %312 = vst.msk [vmem:[%s181] sm:$0x3] %vm311, %v310
      %p313 = scmp.lt.s32.totalorder %s15, 1
      %s314 = scalar_select %p313, %s15, 1
      %s315 = smul.addr %s314, 2
      %s316 = smul.addr %s315, 8
      %s317 = scalar_lea.vmem %s2, %s316
      %p318 = scmp.lt.s32.totalorder %s15, 1
      %s319 = scalar_select %p318, %s15, 1
      %s320 = smul.addr %s319, 2
      %s321 = scalar_lea.vmem %s3, %s320
      // Predicated region
      $region29: #{double_conv1d.3} parent=27 // pred_check
        %p322 = pneg %p80
      $region30: #{double_conv1d.3} parent=27 // pred_check_branch
        %324 = sbr.rel (%p322) target = $region32
      $region31: #{double_conv1d.3} parent=27 // pred_region
        _
      $region32: #{double_conv1d.3} parent=27 // pred_fallthru
        _
      // Predicated region
      $region33: #{double_conv1d.3} parent=27 // pred_check
        %p325 = pneg %p106
      $region34: #{double_conv1d.3} parent=27 // pred_check_branch
        %327 = sbr.rel (%p325) target = $region36
      $region35: #{double_conv1d.3} parent=27 // pred_region
        _
      $region36: #{double_conv1d.3} parent=27 // pred_fallthru
        _
    $region28: #{double_conv1d.3} parent=5 // pred_fallthru
      _
    %p328 = scmp.le.s32.totalorder 2, %s10
    // Predicated region
    $region37: #{double_conv1d.3} parent=5 // pred_check
      %p329 = pneg %p328
    $region38: #{double_conv1d.3} parent=5 // pred_check_branch
      %331 = sbr.rel (%p329) target = $region40
    $region39: #{double_conv1d.3} parent=5 // pred_region
      %s332 = ssub.s32 %s10, 2
      // Predicated region
      $region41: #{double_conv1d.3} parent=39 // pred_check
        %p333 = pneg %p86
      $region42: #{double_conv1d.3} parent=39 // pred_check_branch
        %335 = sbr.rel (%p333) target = $region44
      $region43: #{double_conv1d.3} parent=39 // pred_region
        %p336 = scmp.lt.s32.totalorder %s16, 1
        %s337 = scalar_select %p336, %s16, 1
        %s338 = smul.addr %s337, 2
        %s339 = smul.addr %s338, 8
        %s340 = scalar_lea.vmem %s2, %s339
      $region44: #{double_conv1d.3} parent=39 // pred_fallthru
        _
      // Predicated region
      $region45: #{double_conv1d.3} parent=39 // pred_check
        %p341 = pneg %p112
      $region46: #{double_conv1d.3} parent=39 // pred_check_branch
        %343 = sbr.rel (%p341) target = $region48
      $region47: #{double_conv1d.3} parent=39 // pred_region
        %p344 = scmp.lt.s32.totalorder %s16, 1
        %s345 = scalar_select %p344, %s16, 1
        %s346 = smul.addr %s345, 2
        %s347 = scalar_lea.vmem %s3, %s346
      $region48: #{double_conv1d.3} parent=39 // pred_fallthru
        _
    $region40: #{double_conv1d.3} parent=5 // pred_fallthru
      _
  $region6: #{double_conv1d.3} parent=0 // loop_footer
    %s14 = sadd.s32 1, %s10
  $region7: #{double_conv1d.3} parent=0 // loop_footer_branch
    %9 = sbr.rel target = $region3
  $region8: #{double_conv1d.3} parent=0 // loop_exit
    _

// kernel: double_conv1d.4
$region0: #{double_conv1d.4}
  #allocation0 [shape = 'u32[]', space=smem, size = 0x4, offset = 0x4, fixed_abs, tag = 'smem constant byte address 0x4 - core index']
  #allocation1 [shape = 'u32[72,128]{1,0:T(1,128)}', space=vmem, size = 0x9000, scoped, tag = 'internal scratch']
  %s0 = inlined_call_operand.vmem [shape: f32[2,16,8], index: 0, kind: input, shape index: {}]
  %s1 = inlined_call_operand.vmem [shape: f32[1,8], index: 1, kind: input, shape index: {}]
  %s2 = inlined_call_operand.vmem [shape: f32[1,8], index: 2, kind: input, shape index: {}]
  %s3 = inlined_call_operand.vmem [shape: f32[24,8], index: 3, kind: input, shape index: {}]
  %s4 = inlined_call_operand.vmem [shape: f32[2,16,8], index: 4, kind: output, shape index: {0}]
  %s5 = inlined_call_operand.vmem [shape: f32[2,2,8], index: 5, kind: output, shape index: {1}]
  %6 = xla_tuple %s4, %s5
  %s7 = sld [smem:[#allocation0]]
  $region57: #{double_conv1d.4} parent=0
    _
  %s9 = ssub.s32 1, %s7
  %s10 = scalar_select 0, %s9, %s7
  loop: start=0, step=1, limit=4
  $region2: #{double_conv1d.4} parent=0 // loop_pre_header
    _
  $region3: #{double_conv1d.4} parent=0 // loop_header
    %s12 = sphi 0, %s16
    %p13 = scmp.ge.s32.totalorder %s12, 4
    %s22 = sphi 0, %s24
    %s25 = sphi 0, %s22
    %s26 = sphi 0, %s25
    %s42 = sphi 0, %s26
    %s46 = sphi 0, %s46
    %s48 = sphi 0, %s46
    %s49 = sphi 0, %s48
    %s63 = sphi 0, %s49
    %s67 = sphi 0, %s67
    %s69 = sphi 0, %s67
    %s70 = sphi 0, %s69
    %s84 = sphi 0, %s70
    %s88 = sphi 0, %s88
    %s90 = sphi 0, %s88
    %s91 = sphi 0, %s90
    %s105 = sphi 0, %s91
    %s111 = sphi 0, %s113
    %s114 = sphi 0, %s111
    %s115 = sphi 0, %s114
    %s131 = sphi 0, %s115
    %s137 = sphi 0, %s139
    %s140 = sphi 0, %s137
    %s141 = sphi 0, %s140
    %s157 = sphi 0, %s141
  $region4: #{double_conv1d.4} parent=0 // loop_header_branch
    %15 = sbr.rel (%p13) target = $region8
  $region5: #{double_conv1d.4} parent=0 // loop_body
    %s17 = ssub.s32 %s12, 1
    %s18 = ssub.s32 %s12, 2
    %s19 = sadd.s32 %s12, 1
    %s20 = ssub.s32 %s12, %s19
    %p21 = scmp.eq.s32.totalorder %s20, 0
    %s23 = sadd.s32 %s22, 1
    %s24 = scalar_select %p21, %s22, %s23
    %p27 = pneg %p21
    %p28 = scmp.eq.s32.totalorder %s12, 1
    %p29 = por %p27, %p28
    %p30 = scmp.ne.s32.totalorder %s22, %s25
    %p31 = scmp.eq.s32.totalorder %s12, 0
    %p32 = por %p30, %p31
    %p33 = scmp.ne.s32.totalorder %s22, %s25
    %p34 = scmp.eq.s32.totalorder %s17, 1
    %p35 = por %p33, %p34
    %p36 = scmp.ne.s32.totalorder %s25, %s26
    %p37 = scmp.eq.s32.totalorder %s17, 0
    %p38 = por %p36, %p37
    %p39 = scmp.ne.s32.totalorder %s25, %s26
    %p40 = scmp.eq.s32.totalorder %s18, 1
    %p41 = por %p39, %p40
    %p43 = scmp.ne.s32.totalorder %s26, %s42
    %p44 = scmp.eq.s32.totalorder %s18, 0
    %p45 = por %p43, %p44
    %s47 = sadd.s32 %s46, 1
    %p50 = scmp.eq.s32.totalorder %s12, 1
    %p51 = scmp.ne.s32.totalorder %s46, %s48
    %p52 = scmp.eq.s32.totalorder %s12, 0
    %p53 = por %p51, %p52
    %p54 = scmp.ne.s32.totalorder %s46, %s48
    %p55 = scmp.eq.s32.totalorder %s17, 1
    %p56 = por %p54, %p55
    %p57 = scmp.ne.s32.totalorder %s48, %s49
    %p58 = scmp.eq.s32.totalorder %s17, 0
    %p59 = por %p57, %p58
    %p60 = scmp.ne.s32.totalorder %s48, %s49
    %p61 = scmp.eq.s32.totalorder %s18, 1
    %p62 = por %p60, %p61
    %p64 = scmp.ne.s32.totalorder %s49, %s63
    %p65 = scmp.eq.s32.totalorder %s18, 0
    %p66 = por %p64, %p65
    %s68 = sadd.s32 %s67, 1
    %p71 = scmp.eq.s32.totalorder %s12, 1
    %p72 = scmp.ne.s32.totalorder %s67, %s69
    %p73 = scmp.eq.s32.totalorder %s12, 0
    %p74 = por %p72, %p73
    %p75 = scmp.ne.s32.totalorder %s67, %s69
    %p76 = scmp.eq.s32.totalorder %s17, 1
    %p77 = por %p75, %p76
    %p78 = scmp.ne.s32.totalorder %s69, %s70
    %p79 = scmp.eq.s32.totalorder %s17, 0
    %p80 = por %p78, %p79
    %p81 = scmp.ne.s32.totalorder %s69, %s70
    %p82 = scmp.eq.s32.totalorder %s18, 1
    %p83 = por %p81, %p82
    %p85 = scmp.ne.s32.totalorder %s70, %s84
    %p86 = scmp.eq.s32.totalorder %s18, 0
    %p87 = por %p85, %p86
    %s89 = sadd.s32 %s88, 1
    %p92 = scmp.eq.s32.totalorder %s12, 1
    %p93 = scmp.ne.s32.totalorder %s88, %s90
    %p94 = scmp.eq.s32.totalorder %s12, 0
    %p95 = por %p93, %p94
    %p96 = scmp.ne.s32.totalorder %s88, %s90
    %p97 = scmp.eq.s32.totalorder %s17, 1
    %p98 = por %p96, %p97
    %p99 = scmp.ne.s32.totalorder %s90, %s91
    %p100 = scmp.eq.s32.totalorder %s17, 0
    %p101 = por %p99, %p100
    %p102 = scmp.ne.s32.totalorder %s90, %s91
    %p103 = scmp.eq.s32.totalorder %s18, 1
    %p104 = por %p102, %p103
    %p106 = scmp.ne.s32.totalorder %s91, %s105
    %p107 = scmp.eq.s32.totalorder %s18, 0
    %p108 = por %p106, %p107
    %s109 = ssub.s32 %s12, %s19
    %p110 = scmp.eq.s32.totalorder %s109, 0
    %s112 = sadd.s32 %s111, 1
    %s113 = scalar_select %p110, %s111, %s112
    %p116 = pneg %p110
    %p117 = scmp.eq.s32.totalorder %s12, 1
    %p118 = por %p116, %p117
    %p119 = scmp.ne.s32.totalorder %s111, %s114
    %p120 = scmp.eq.s32.totalorder %s12, 0
    %p121 = por %p119, %p120
    %p122 = scmp.ne.s32.totalorder %s111, %s114
    %p123 = scmp.eq.s32.totalorder %s17, 1
    %p124 = por %p122, %p123
    %p125 = scmp.ne.s32.totalorder %s114, %s115
    %p126 = scmp.eq.s32.totalorder %s17, 0
    %p127 = por %p125, %p126
    %p128 = scmp.ne.s32.totalorder %s114, %s115
    %p129 = scmp.eq.s32.totalorder %s18, 1
    %p130 = por %p128, %p129
    %p132 = scmp.ne.s32.totalorder %s115, %s131
    %p133 = scmp.eq.s32.totalorder %s18, 0
    %p134 = por %p132, %p133
    %s135 = ssub.s32 %s12, %s19
    %p136 = scmp.eq.s32.totalorder %s135, 0
    %s138 = sadd.s32 %s137, 1
    %s139 = scalar_select %p136, %s137, %s138
    %p142 = pneg %p136
    %p143 = scmp.eq.s32.totalorder %s12, 1
    %p144 = por %p142, %p143
    %p145 = scmp.ne.s32.totalorder %s137, %s140
    %p146 = scmp.eq.s32.totalorder %s12, 0
    %p147 = por %p145, %p146
    %p148 = scmp.ne.s32.totalorder %s137, %s140
    %p149 = scmp.eq.s32.totalorder %s17, 1
    %p150 = por %p148, %p149
    %p151 = scmp.ne.s32.totalorder %s140, %s141
    %p152 = scmp.eq.s32.totalorder %s17, 0
    %p153 = por %p151, %p152
    %p154 = scmp.ne.s32.totalorder %s140, %s141
    %p155 = scmp.eq.s32.totalorder %s18, 1
    %p156 = por %p154, %p155
    %p158 = scmp.ne.s32.totalorder %s141, %s157
    %p159 = scmp.eq.s32.totalorder %s18, 0
    %p160 = por %p158, %p159
    %p161 = scmp.le.s32.totalorder 1, %s12
    %p162 = scmp.lt.s32.totalorder %s12, 3
    %p163 = pnand %p161, %p162
    %p164 = pneg %p163
    // Predicated region
    $region9: #{double_conv1d.4} parent=5 // pred_check
      _
    $region10: #{double_conv1d.4} parent=5 // pred_check_branch
      %166 = sbr.rel (%p163) target = $region12
    $region11: #{double_conv1d.4} parent=5 // pred_region
      %s167 = ssub.s32 %s12, 1
      // Predicated region
      $region13: #{double_conv1d.4} parent=11 // pred_check
        %p168 = pneg %p59
      $region14: #{double_conv1d.4} parent=11 // pred_check_branch
        %170 = sbr.rel (%p168) target = $region16
      $region15: #{double_conv1d.4} parent=11 // pred_region
        _
      $region16: #{double_conv1d.4} parent=11 // pred_fallthru
        _
      // Predicated region
      $region17: #{double_conv1d.4} parent=11 // pred_check
        %p171 = pneg %p80
      $region18: #{double_conv1d.4} parent=11 // pred_check_branch
        %173 = sbr.rel (%p171) target = $region20
      $region19: #{double_conv1d.4} parent=11 // pred_region
        _
      $region20: #{double_conv1d.4} parent=11 // pred_fallthru
        _
      // Predicated region
      $region21: #{double_conv1d.4} parent=11 // pred_check
        %p174 = pneg %p101
      $region22: #{double_conv1d.4} parent=11 // pred_check_branch
        %176 = sbr.rel (%p174) target = $region24
      $region23: #{double_conv1d.4} parent=11 // pred_region
        _
      $region24: #{double_conv1d.4} parent=11 // pred_fallthru
        _
    $region12: #{double_conv1d.4} parent=5 // pred_fallthru
      _
    %p177 = scmp.lt.s32.totalorder %s12, 2
    // Predicated region
    $region25: #{double_conv1d.4} parent=5 // pred_check
      %p178 = pneg %p177
    $region26: #{double_conv1d.4} parent=5 // pred_check_branch
      %180 = sbr.rel (%p178) target = $region28
    $region27: #{double_conv1d.4} parent=5 // pred_region
      // Predicated region
      $region29: #{double_conv1d.4} parent=27 // pred_check
        %p181 = pneg %p32
      $region30: #{double_conv1d.4} parent=27 // pred_check_branch
        %183 = sbr.rel (%p181) target = $region32
      $region31: #{double_conv1d.4} parent=27 // pred_region
        %p184 = scmp.lt.s32.totalorder %s12, 1
        %s185 = scalar_select %p184, %s12, 1
        %s186 = smul.addr %s185, 2
        %s187 = smul.addr %s186, 8
        %s188 = scalar_lea.vmem %s0, %s187
      $region32: #{double_conv1d.4} parent=27 // pred_fallthru
        _
    $region28: #{double_conv1d.4} parent=5 // pred_fallthru
      _
    %p189 = scmp.le.s32.totalorder 1, %s12
    %p190 = scmp.lt.s32.totalorder %s12, 3
    %p191 = pnand %p189, %p190
    %p192 = pneg %p191
    // Predicated region
    $region33: #{double_conv1d.4} parent=5 // pred_check
      _
    $region34: #{double_conv1d.4} parent=5 // pred_check_branch
      %194 = sbr.rel (%p191) target = $region36
    $region35: #{double_conv1d.4} parent=5 // pred_region
      %s195 = ssub.s32 %s12, 1
      %p196 = scmp.lt.s32.totalorder %s17, 1
      %s197 = scalar_select %p196, %s17, 1
      %s198 = smul.addr %s197, 2
      %s199 = smul.addr %s198, 8
      %s200 = scalar_lea.vmem %s0, %s199
      %p201 = pneg %p38
      %p202 = pneg %p35
      %p203 = pneg %p59
      %p204 = pneg %p56
      %p205 = pneg %p80
      %p206 = pneg %p77
      %p207 = pneg %p101
      %p208 = pneg %p98
      %p209 = pneg %p127
      %p210 = pneg %p124
      %p211 = scmp.lt.s32.totalorder %s17, 1
      %s212 = scalar_select %p211, %s17, 1
      %s213 = smul.addr %s212, 2
      %s214 = smul.addr %s213, 8
      %s215 = scalar_lea.vmem %s4, %s214
      %p216 = pneg %p153
      %p217 = pneg %p150
      %p218 = scmp.lt.s32.totalorder %s17, 1
      %s219 = scalar_select %p218, %s17, 1
      %s220 = smul.addr %s219, 2
      %s221 = scalar_lea.vmem %s5, %s220
      %p222 = scmp.lt.s32.totalorder %s17, 1
      %s223 = scalar_select %p222, %s17, 1
      %s224 = smul.addr %s223, 2
      %s225 = smul.addr %s224, 8
      %s226 = scalar_lea.vmem %s0, %s225
      %p227 = scmp.lt.s32.totalorder %s17, 1
      %s228 = scalar_select %p227, %s17, 1
      %s229 = smul.addr %s228, 2
      %s230 = smul.addr %s229, 8
      %s231 = scalar_lea.vmem %s4, %s230
      %p232 = scmp.lt.s32.totalorder %s17, 1
      %s233 = scalar_select %p232, %s17, 1
      %s234 = smul.addr %s233, 2
      %s235 = scalar_lea.vmem %s5, %s234
      %v236 = vld [vmem:[%s226] sm:$0xff]
      %v237 = vld [vmem:[%s226 + $0x8] sm:$0xff]
      %v238 = vld [vmem:[%s1] sm:$0x1]
      %v240 = vperm.slane %v238, 0
      %v242 = vmul.f32 %v236, %v240
      %v243 = vmul.f32 %v237, %v240
      %v244 = vld [vmem:[%s2] sm:$0x1]
      %v246 = vperm.slane %v244, 0
      %v248 = vadd.f32 %v242, %v246
      %v249 = vadd.f32 %v243, %v246
      %v250 = vmax.f32 %v248, 0.0
      %v251 = vmax.f32 %v249, 0.0
      %v252 = vlaneseq
      %v253 = vshrl.u32 %v252, 7
      %v254 = vadd.s32 %v253, 8
      %vm255 = vcmp.lt.s32.totalorder %v253, 0
      %v256 = vsub.s32 0, %v253
      %v257 = vsel %vm255, %v256, %v253
      %v258 = vshrl.u32 %v257, 4
      %v259 = vand.u32 %v257, 15
      %v260 = vsub.s32 0, %v259
      %v261 = vsel %vm255, %v260, %v259
      %vm262 = vcmp.lt.s32.totalorder %v254, 0
      %v263 = vsub.s32 0, %v254
      %v264 = vsel %vm262, %v263, %v254
      %v265 = vshrl.u32 %v264, 4
      %v266 = vand.u32 %v264, 15
      %v267 = vsub.s32 0, %v266
      %v268 = vsel %vm262, %v267, %v266
      %vm269 = vcmp.ne.s32.totalorder %v261, 0
      %vm270 = vcmp.ne.s32.totalorder %v268, 0
      %vm271 = vcmp.lt.s32.totalorder %v261, 0
      %vm272 = vcmp.lt.s32.totalorder %v268, 0
      %vm273 = vmand %vm271, %vm269
      %vm274 = vmand %vm272, %vm270
      %v275 = vadd.s32 %v261, 16
      %v276 = vadd.s32 %v268, 16
      %v277 = vsel %vm273, %v275, %v261
      %v278 = vsel %vm274, %v276, %v268
      %vm279 = vcmp.eq.s32.totalorder %v277, 0
      %vm280 = vcmp.eq.s32.totalorder %v278, 0
      %v281 = vrot.slane %v250, 7
      %v282 = vrot.slane %v251, 7
      %vm283 = vcmp.lt.s32.totalorder %v253, 1
      %v284 = vsel %vm283, %v281, %v282
      %v285 = vsel %vm283, %v282, %v281
      %v286 = vsel %vm279, 0.0, %v285
      %v287 = vsel %vm280, 0.0, %v284
      %vm288 = vcmp.eq.s32.totalorder %v277, 15
      %vm289 = vcmp.eq.s32.totalorder %v278, 15
      %v290 = vrot.slane %v250, 1
      %v291 = vrot.slane %v251, 1
      %vm292 = vcmp.lt.s32.totalorder %v253, 7
      %v293 = vsel %vm292, %v290, %v291
      %v294 = vsel %vm292, %v291, %v290
      %v295 = vsel %vm288, 0.0, %v293
      %v296 = vsel %vm289, 0.0, %v294
      %299 = vrot.lane.b32.xlu0 %v250, 8
      %v300 = vpop.permute.xlu0 %299
      %301 = vrot.lane.b32.xlu0 %v251, 8
      %v302 = vpop.permute.xlu0 %301
      %307 = vrot.lane.b32.xlu0 %v295, 16
      %v308 = vpop.permute.xlu0 %307
      %309 = vrot.lane.b32.xlu0 %v296, 16
      %v310 = vpop.permute.xlu0 %309
      %vm313 = vcmask 64512
      %v314 = vsel %vm313, %v286, %v300
      %v315 = vsel %vm313, %v287, %v302
      %vm316 = vcmask 130048
      %v317 = vsel %vm316, %v314, %v308
      %v318 = vsel %vm316, %v315, %v310
      %v319 = vld [vmem:[%s3] sm:$0xff]
      %v320 = vld [vmem:[%s3 + $0x8] sm:$0xff]
      %v321 = vld [vmem:[%s3 + $0x10] sm:$0xff]
      %vm322 = vcmask 195584
      %v324 = vsel %vm322, %v317, 0
      %v327 = vsel %vm322, %v318, 0
      %329 = vmatpush.msra.mxu0 0.0
      %330 = vmatpush.msra.mxu0 0.0
      %331 = vmatpush.msra.mxu0 0.0
      %332 = vmatpush.msra.mxu0 0.0
      %333 = vmatpush.msra.mxu0 0.0
      %334 = vmatpush.msra.mxu0 0.0
      %335 = vmatpush.msra.mxu0 0.0
      %336 = vmatpush.msra.mxu0 0.0
      %337 = vmatpush.msra.mxu0 0.0
      %338 = vmatpush.msra.mxu0 0.0
      %339 = vmatpush.msra.mxu0 0.0
      %340 = vmatpush.msra.mxu0 0.0
      %341 = vmatpush.msra.mxu0 0.0
      %342 = vmatpush.msra.mxu0 %v321
      %343 = vmatpush.msra.mxu0 %v320
      %344 = vmatpush.msra.mxu0 %v319
      %345 = vmatmul.f32.gmra.mxu0 %v324
      %v346 = vpop.f32.mrf.mxu0
      %v347 = vadd.f32 0.0, %v346
      %348 = vmatmul.f32.gmra.mxu0 %v327
      %v349 = vpop.f32.mrf.mxu0
      %v350 = vadd.f32 0.0, %v349
      %351 = vdwg.mxu0
      %352 = vst.msk [vmem:[%s231] sm:$0xff] %vm313, %v347
      %353 = vst.msk [vmem:[%s231 + $0x8] sm:$0xff] %vm313, %v350
      %v354 = vsel %vm313, %v347, 0.0
      %v355 = vsel %vm313, %v350, 0.0
      %v356 = vadd.f32 %v354, %v355
      %v357 = vrot.slane %v356, 4
      %v358 = vadd.f32 %v356, %v357
      %v359 = vrot.slane %v358, 2
      %v360 = vadd.f32 %v358, %v359
      %v361 = vrot.slane %v360, 1
      %v362 = vadd.f32 %v360, %v361
      %v363 = vmul.f32 %v347, %v347
      %v364 = vmul.f32 %v350, %v350
      %v365 = vsel %vm313, %v363, 0.0
      %v366 = vsel %vm313, %v364, 0.0
      %v367 = vadd.f32 %v365, %v366
      %v368 = vrot.slane %v367, 4
      %v369 = vadd.f32 %v367, %v368
      %v370 = vrot.slane %v369, 2
      %v371 = vadd.f32 %v369, %v370
      %v372 = vrot.slane %v371, 1
      %v373 = vadd.f32 %v371, %v372
      %vm374 = vcmask 1040384
      %v375 = vsel %vm374, %v362, %v373
      %vm376 = vcmask 58368
      %377 = vst.msk [vmem:[%s235] sm:$0x3] %vm376, %v375
      %p378 = scmp.lt.s32.totalorder %s17, 1
      %s379 = scalar_select %p378, %s17, 1
      %s380 = smul.addr %s379, 2
      %s381 = smul.addr %s380, 8
      %s382 = scalar_lea.vmem %s4, %s381
      %p383 = scmp.lt.s32.totalorder %s17, 1
      %s384 = scalar_select %p383, %s17, 1
      %s385 = smul.addr %s384, 2
      %s386 = scalar_lea.vmem %s5, %s385
      // Predicated region
      $region37: #{double_conv1d.4} parent=35 // pred_check
        %p387 = pneg %p124
      $region38: #{double_conv1d.4} parent=35 // pred_check_branch
        %389 = sbr.rel (%p387) target = $region40
      $region39: #{double_conv1d.4} parent=35 // pred_region
        _
      $region40: #{double_conv1d.4} parent=35 // pred_fallthru
        _
      // Predicated region
      $region41: #{double_conv1d.4} parent=35 // pred_check
        %p390 = pneg %p150
      $region42: #{double_conv1d.4} parent=35 // pred_check_branch
        %392 = sbr.rel (%p390) target = $region44
      $region43: #{double_conv1d.4} parent=35 // pred_region
        _
      $region44: #{double_conv1d.4} parent=35 // pred_fallthru
        _
    $region36: #{double_conv1d.4} parent=5 // pred_fallthru
      _
    %p393 = scmp.le.s32.totalorder 2, %s12
    // Predicated region
    $region45: #{double_conv1d.4} parent=5 // pred_check
      %p394 = pneg %p393
    $region46: #{double_conv1d.4} parent=5 // pred_check_branch
      %396 = sbr.rel (%p394) target = $region48
    $region47: #{double_conv1d.4} parent=5 // pred_region
      %s397 = ssub.s32 %s12, 2
      // Predicated region
      $region49: #{double_conv1d.4} parent=47 // pred_check
        %p398 = pneg %p130
      $region50: #{double_conv1d.4} parent=47 // pred_check_branch
        %400 = sbr.rel (%p398) target = $region52
      $region51: #{double_conv1d.4} parent=47 // pred_region
        %p401 = scmp.lt.s32.totalorder %s18, 1
        %s402 = scalar_select %p401, %s18, 1
        %s403 = smul.addr %s402, 2
        %s404 = smul.addr %s403, 8
        %s405 = scalar_lea.vmem %s4, %s404
      $region52: #{double_conv1d.4} parent=47 // pred_fallthru
        _
      // Predicated region
      $region53: #{double_conv1d.4} parent=47 // pred_check
        %p406 = pneg %p156
      $region54: #{double_conv1d.4} parent=47 // pred_check_branch
        %408 = sbr.rel (%p406) target = $region56
      $region55: #{double_conv1d.4} parent=47 // pred_region
        %p409 = scmp.lt.s32.totalorder %s18, 1
        %s410 = scalar_select %p409, %s18, 1
        %s411 = smul.addr %s410, 2
        %s412 = scalar_lea.vmem %s5, %s411
      $region56: #{double_conv1d.4} parent=47 // pred_fallthru
        _
    $region48: #{double_conv1d.4} parent=5 // pred_fallthru
      _
  $region6: #{double_conv1d.4} parent=0 // loop_footer
    %s16 = sadd.s32 1, %s12
  $region7: #{double_conv1d.4} parent=0 // loop_footer_branch
    %11 = sbr.rel target = $region3
  $region8: #{double_conv1d.4} parent=0 // loop_exit
    _

</llo_original>
